<compile_context>
chip_gen: v5e
topology: v5e:2x2
jax: 0.10.0
libtpu: 0.0.40
codegen_flags: <defaults>
</compile_context>

<pallas_src>
import functools

import jax
import jax.numpy as jnp
from jax.experimental import pallas as pl
from jax.experimental.pallas import tpu as pltpu

_CHUNK = 2048  # default lane-chunk width for the in-kernel class loop (multiple of 128)


def _lsce_kernel(logits_ref, target_ref, part_ref, *, smoothing: float,
                 batch_size: int, chunk: int):
    # logits_ref: (TB, C) VMEM, native dtype.  target_ref: (TB, 1) int32 VMEM.
    # part_ref:   (1, 1, 1) f32 VMEM — this program's partial loss sum.
    i = pl.program_id(0)
    tb, c = logits_ref.shape
    n_full = c // chunk
    tail = c - n_full * chunk

    t = target_ref[...].astype(jnp.int32)                     # (TB, 1)

    # ---------- pass 1: running row max over column chunks --------------------
    def _chunk_max(c0, width, m):
        xc = logits_ref[:, pl.ds(c0, width)].astype(jnp.float32)
        return jnp.maximum(m, jnp.max(xc, axis=-1, keepdims=True))

    m = jnp.full((tb, 1), -jnp.inf, dtype=jnp.float32)
    if n_full > 0:
        def _max_body(s, m):
            c0 = pl.multiple_of(s * chunk, chunk)
            return _chunk_max(c0, chunk, m)
        m = jax.lax.fori_loop(0, n_full, _max_body, m)
    if tail > 0:
        m = _chunk_max(n_full * chunk, tail, m)                # static slice, stops at C

    # ---------- pass 2 (fused): sum(exp(x-m)), sum(x-m), (x_t - m) ------------
    def _chunk_stats(c0, width, carry):
        se, ss, xt = carry
        xs = logits_ref[:, pl.ds(c0, width)].astype(jnp.float32) - m   # (TB, W)
        se = se + jnp.sum(jnp.exp(xs), axis=-1, keepdims=True)
        ss = ss + jnp.sum(xs, axis=-1, keepdims=True)
        col = c0 + jax.lax.broadcasted_iota(jnp.int32, (tb, width), 1)  # per-chunk iota
        xt = xt + jnp.sum(jnp.where(col == t, xs, 0.0), axis=-1, keepdims=True)
        return se, ss, xt

    zeros = jnp.zeros((tb, 1), jnp.float32)
    carry = (zeros, zeros, zeros)
    if n_full > 0:
        def _stat_body(s, carry):
            c0 = pl.multiple_of(s * chunk, chunk)
            return _chunk_stats(c0, chunk, carry)
        carry = jax.lax.fori_loop(0, n_full, _stat_body, carry)
    if tail > 0:
        carry = _chunk_stats(n_full * chunk, tail, carry)
    sum_exp, sum_shift, xt_shift = carry

    # per_row = -[(1-s)*lp_t + s/(C-1)*(sum_lp - lp_t)]   (all in shifted space)
    w_off = jnp.float32(smoothing / (c - 1))
    w_on = jnp.float32(1.0 - smoothing)
    log_z = jnp.log(sum_exp)                                   # = lse - m
    lp_t = xt_shift - log_z
    sum_lp = sum_shift - jnp.float32(c) * log_z
    per_row = -((w_on - w_off) * lp_t + w_off * sum_lp)        # (TB, 1)

    # Mask padded rows of a partial last tile (keep the mask on per_row only).
    row = i * tb + jax.lax.broadcasted_iota(jnp.int32, (tb, 1), 0)
    per_row = jnp.where(row < batch_size, per_row, 0.0)

    part_ref[...] = jnp.sum(per_row, axis=0, keepdims=True).reshape(1, 1, 1)


def _vmem_limit_bytes():
    """Generation-aware scoped-VMEM limit (~75% of physical VMEM)."""
    try:
        cap = int(pltpu.get_tpu_info().vmem_capacity_bytes)
    except Exception:
        cap = 64 * 1024 * 1024          # conservative (v7x-sized) fallback
    return max(32 * 1024 * 1024, (cap * 3) // 4)


def _choose_block_b(batch, num_classes, itemsize, vmem_limit, chunk):
    """Largest batch tile whose double-buffered native logits block plus f32
    chunk temporaries fits within ~70% of the VMEM limit, rounded to the
    dtype's sublane tile (8 f32 / 16 bf16 / 32 int8)."""
    sub = max(8, 32 // itemsize)
    if batch <= sub:
        return batch
    budget = (vmem_limit * 7) // 10
    per_row = 2 * num_classes * itemsize + 3 * min(num_classes, chunk) * 4 + 8
    max_tb = max(sub, budget // per_row)
    tb = min(batch, max_tb, 4096)
    return max(sub, (tb // sub) * sub)


def label_smoothing_cross_entropy(logits, target, smoothing: float = 0.1,
                                  block_b=None, chunk: int = _CHUNK):
    """logits: (B, C) float array (f32 or bf16); target: (B,) int class indices."""
    B, C = logits.shape
    target2d = target.astype(jnp.int32).reshape(B, 1)
    itemsize = jnp.dtype(logits.dtype).itemsize
    vmem_limit = _vmem_limit_bytes()
    if block_b is None:
        block_b = _choose_block_b(B, C, itemsize, vmem_limit, chunk)

    num_blocks = pl.cdiv(B, block_b)
    kernel = functools.partial(_lsce_kernel, smoothing=float(smoothing),
                               batch_size=B, chunk=int(chunk))

    partials = pl.pallas_call(
        kernel,
        out_shape=jax.ShapeDtypeStruct((num_blocks, 1, 1), jnp.float32),
        grid=(num_blocks,),
        in_specs=[
            pl.BlockSpec((block_b, C), lambda i: (i, 0)),
            pl.BlockSpec((block_b, 1), lambda i: (i, 0)),
        ],
        # One partial sum per grid step -> no carried accumulator, axis is truly
        # parallel (both TensorCores on v7x); final reduction below is trivial.
        out_specs=pl.BlockSpec((1, 1, 1), lambda i: (i, 0, 0)),
        compiler_params=pltpu.CompilerParams(
            dimension_semantics=("parallel",),
            vmem_limit_bytes=int(vmem_limit),
        ),
    )(logits, target2d)
    return jnp.sum(partials) / jnp.float32(B)


def _reference(logits, target, smoothing=0.1):
    # Pure-JAX reference mirroring the PyTorch module exactly.
    logits = logits.astype(jnp.float32)
    log_prob = jax.nn.log_softmax(logits, axis=-1)
    C = logits.shape[-1]
    weight = jnp.full_like(logits, smoothing / (C - 1))
    onehot = jax.nn.one_hot(target, C, dtype=jnp.bool_)
    weight = jnp.where(onehot, 1.0 - smoothing, weight)
    return jnp.mean(jnp.sum(-weight * log_prob, axis=-1))


if __name__ == "__main__":
    key = jax.random.PRNGKey(0)
    k1, k2, k3, k4, k5, k6 = jax.random.split(key, 6)

    # Case 1: f32 logits, single tile (B <= sublane tile).
    B, C = 8, 32
    logits = jax.random.normal(k1, (B, C), dtype=jnp.float32)
    target = jax.random.randint(k2, (B,), 0, C, dtype=jnp.int32)
    loss = jax.block_until_ready(
        label_smoothing_cross_entropy(logits, target, smoothing=0.1))
    ref = _reference(logits, target, smoothing=0.1)
    assert jnp.allclose(loss, ref, atol=1e-5, rtol=1e-5), (loss, ref)

    # Case 2: bf16 logits (native-dtype DMA, 16-row sublane tile), B not a
    # multiple of the tile (padded-row mask), C not a multiple of 128, grid of 2
    # parallel partial sums.
    B2, C2 = 24, 160
    logits2 = jax.random.normal(k3, (B2, C2), dtype=jnp.float32).astype(jnp.bfloat16)
    target2 = jax.random.randint(k4, (B2,), 0, C2, dtype=jnp.int32)
    loss2 = jax.block_until_ready(
        label_smoothing_cross_entropy(logits2, target2, smoothing=0.1, block_b=16))
    ref2 = _reference(logits2, target2, smoothing=0.1)
    assert jnp.allclose(loss2, ref2, atol=1e-4, rtol=1e-4), (loss2, ref2)

    # Case 3: exercises the chunked class loop (fori_loop chunks + static tail)
    # and a multi-step grid (block_b=8, chunk=256, C=640 -> 2 full chunks + tail).
    B3, C3 = 16, 640
    logits3 = jax.random.normal(k5, (B3, C3), dtype=jnp.float32)
    target3 = jax.random.randint(k6, (B3,), 0, C3, dtype=jnp.int32)
    loss3 = jax.block_until_ready(
        label_smoothing_cross_entropy(logits3, target3, smoothing=0.1,
                                      block_b=8, chunk=256))
    ref3 = _reference(logits3, target3, smoothing=0.1)
    assert jnp.allclose(loss3, ref3, atol=1e-5, rtol=1e-5), (loss3, ref3)

    print("KERNEL_OK")
</pallas_src>

<mosaic_0001>
module attributes {stable_mosaic.version = 11 : i64} {
  func.func @_lsce_kernel(%arg0: i32, %arg1: memref<8x32xf32, #tpu.memory_space<vmem>>, %arg2: memref<8x1xi32, #tpu.memory_space<vmem>>, %arg3: memref<1x1x1xf32, #tpu.memory_space<vmem>>) attributes {dimension_semantics = [#tpu.dimension_semantics<parallel>], iteration_bounds = array<i64: 1>, scalar_prefetch = 0 : i64, scratch_operands = 0 : i64, tpu.core_type = #tpu.core_type<tc>, window_params = [{transform_indices = @transform_0, window_bounds = array<i64: 8, 32>}, {transform_indices = @transform_1, window_bounds = array<i64: 8, 1>}, {transform_indices = @transform_2, window_bounds = array<i64: 1, 1, 1>}]} {
    %c0 = arith.constant 0 : index
    %c0_0 = arith.constant 0 : index
    %0 = vector.load %arg2[%c0, %c0_0] : memref<8x1xi32, #tpu.memory_space<vmem>>, vector<8x1xi32>
    %cst = arith.constant 0xFF800000 : f32
    %1 = vector.broadcast %cst : f32 to vector<8x1xf32>
    %c0_1 = arith.constant 0 : index
    %c0_2 = arith.constant 0 : index
    %2 = vector.load %arg1[%c0_1, %c0_2] : memref<8x32xf32, #tpu.memory_space<vmem>>, vector<8x32xf32>
    %cst_3 = arith.constant dense<0xFF800000> : vector<8xf32>
    %3 = vector.multi_reduction <maximumf>, %2, %cst_3 [1] : vector<8x32xf32> to vector<8xf32>
    %4 = vector.shape_cast %3 : vector<8xf32> to vector<8x1xf32>
    %5 = arith.maximumf %1, %4 : vector<8x1xf32>
    %cst_4 = arith.constant 0.000000e+00 : f32
    %6 = vector.broadcast %cst_4 : f32 to vector<8x1xf32>
    %c0_5 = arith.constant 0 : index
    %c0_6 = arith.constant 0 : index
    %7 = vector.load %arg1[%c0_5, %c0_6] : memref<8x32xf32, #tpu.memory_space<vmem>>, vector<8x32xf32>
    %8 = vector.broadcast %5 : vector<8x1xf32> to vector<8x32xf32>
    %9 = arith.subf %7, %8 : vector<8x32xf32>
    %10 = math.exp %9 : vector<8x32xf32>
    %cst_7 = arith.constant dense<0.000000e+00> : vector<8xf32>
    %11 = vector.multi_reduction <add>, %10, %cst_7 [1] : vector<8x32xf32> to vector<8xf32>
    %12 = vector.shape_cast %11 : vector<8xf32> to vector<8x1xf32>
    %13 = arith.addf %6, %12 : vector<8x1xf32>
    %cst_8 = arith.constant dense<0.000000e+00> : vector<8xf32>
    %14 = vector.multi_reduction <add>, %9, %cst_8 [1] : vector<8x32xf32> to vector<8xf32>
    %15 = vector.shape_cast %14 : vector<8xf32> to vector<8x1xf32>
    %16 = arith.addf %6, %15 : vector<8x1xf32>
    %17 = tpu.iota {dimensions = array<i32: 1>} : vector<8x32xi32>
    %c0_i32 = arith.constant 0 : i32
    %18 = vector.broadcast %c0_i32 : i32 to vector<8x32xi32>
    %19 = arith.addi %18, %17 : vector<8x32xi32>
    %20 = vector.broadcast %0 : vector<8x1xi32> to vector<8x32xi32>
    %21 = arith.cmpi eq, %19, %20 : vector<8x32xi32>
    %cst_9 = arith.constant 0.000000e+00 : f32
    %22 = vector.broadcast %cst_9 : f32 to vector<8x32xf32>
    %23 = arith.select %21, %9, %22 : vector<8x32xi1>, vector<8x32xf32>
    %cst_10 = arith.constant dense<0.000000e+00> : vector<8xf32>
    %24 = vector.multi_reduction <add>, %23, %cst_10 [1] : vector<8x32xf32> to vector<8xf32>
    %25 = vector.shape_cast %24 : vector<8xf32> to vector<8x1xf32>
    %26 = arith.addf %6, %25 : vector<8x1xf32>
    %27 = math.log %13 : vector<8x1xf32>
    %28 = arith.subf %26, %27 : vector<8x1xf32>
    %cst_11 = arith.constant 3.200000e+01 : f32
    %29 = vector.broadcast %cst_11 : f32 to vector<8x1xf32>
    %30 = arith.mulf %29, %27 : vector<8x1xf32>
    %31 = arith.subf %16, %30 : vector<8x1xf32>
    %cst_12 = arith.constant 0.899999976 : f32
    %cst_13 = arith.constant 0.0032258064 : f32
    %32 = arith.subf %cst_12, %cst_13 : f32
    %33 = vector.broadcast %32 : f32 to vector<8x1xf32>
    %34 = arith.mulf %33, %28 : vector<8x1xf32>
    %cst_14 = arith.constant 0.0032258064 : f32
    %35 = vector.broadcast %cst_14 : f32 to vector<8x1xf32>
    %36 = arith.mulf %35, %31 : vector<8x1xf32>
    %37 = arith.addf %34, %36 : vector<8x1xf32>
    %cst_15 = arith.constant 0.000000e+00 : f32
    %38 = vector.broadcast %cst_15 : f32 to vector<8x1xf32>
    %39 = arith.subf %38, %37 : vector<8x1xf32>
    %c8_i32 = arith.constant 8 : i32
    %40 = arith.muli %arg0, %c8_i32 : i32
    %41 = tpu.iota {dimensions = array<i32: 0>} : vector<8x1xi32>
    %42 = vector.broadcast %40 : i32 to vector<8x1xi32>
    %43 = arith.addi %42, %41 : vector<8x1xi32>
    %c8_i32_16 = arith.constant 8 : i32
    %44 = vector.broadcast %c8_i32_16 : i32 to vector<8x1xi32>
    %45 = arith.cmpi slt, %43, %44 : vector<8x1xi32>
    %cst_17 = arith.constant 0.000000e+00 : f32
    %46 = vector.broadcast %cst_17 : f32 to vector<8x1xf32>
    %47 = arith.select %45, %39, %46 : vector<8x1xi1>, vector<8x1xf32>
    %cst_18 = arith.constant dense<0.000000e+00> : vector<1xf32>
    %48 = vector.multi_reduction <add>, %47, %cst_18 [0] : vector<8x1xf32> to vector<1xf32>
    %49 = vector.shape_cast %48 : vector<1xf32> to vector<1x1xf32>
    %50 = vector.shape_cast %49 : vector<1x1xf32> to vector<1x1x1xf32>
    %c0_19 = arith.constant 0 : index
    %c0_20 = arith.constant 0 : index
    %c0_21 = arith.constant 0 : index
    %51 = vector.load %arg3[%c0_19, %c0_20, %c0_21] : memref<1x1x1xf32, #tpu.memory_space<vmem>>, vector<1x1x1xf32>
    tpu.vector_store %arg3[%c0_19, %c0_20, %c0_21], %50 {strides = array<i32>} : memref<1x1x1xf32, #tpu.memory_space<vmem>>, vector<1x1x1xf32>,
    return
  }
  func.func @transform_0(%arg0: i32) -> (i32, i32) {
    %c0_i32 = arith.constant 0 : i32
    %c0_i32_0 = arith.constant 0 : i32
    return %arg0, %c0_i32 : i32, i32
  }
  func.func @transform_1(%arg0: i32) -> (i32, i32) {
    %c0_i32 = arith.constant 0 : i32
    %c0_i32_0 = arith.constant 0 : i32
    return %arg0, %c0_i32 : i32, i32
  }
  func.func @transform_2(%arg0: i32) -> (i32, i32, i32) {
    %c0_i32 = arith.constant 0 : i32
    %c0_i32_0 = arith.constant 0 : i32
    %c0_i32_1 = arith.constant 0 : i32
    return %arg0, %c0_i32, %c0_i32_0 : i32, i32, i32
  }
}

</mosaic_0001>

<llo_original>
// kernel: tpu_custom_call.1
$region0: #{tpu_custom_call.1}
  #allocation0 [shape = 'u32[]', space=smem, size = 0x4, offset = 0x4, fixed_abs, tag = 'smem constant byte address 0x4 - core index']
  #allocation1 [shape = 'u32[72,128]{1,0:T(1,128)}', space=vmem, size = 0x9000, scoped, tag = 'internal scratch']
  %s0 = inlined_call_operand.vmem [shape: f32[8,32], index: 0, kind: input, shape index: {}]
  %s1 = inlined_call_operand.vmem [shape: s32[8,1], index: 1, kind: input, shape index: {}]
  %s2 = inlined_call_operand.hbm [shape: f32[1,1,1], index: 2, kind: output, shape index: {}]
  %s3 = sld [smem:[#allocation0]]
  $region18: #{tpu_custom_call.1} parent=0
    _
  %s5 = ssub.s32 1, %s3
  %s6 = scalar_select 0, %s5, %s3
  $region1: #{tpu_custom_call.1} parent=0
    #allocation2 [shape = 'u8[512]{0}', space=vmem, size = 0x400, scoped, tag = 'output window, operand 0, single buffered']
    #allocation3 [shape = 's32[1]{0}', space=sflag, size = 0x4, scoped, tag = 'scoped memory for tpu_custom_call.1']
    %7 = vsyncpa [#allocation3], 0
    // Predicated region
    $region2: #{tpu_custom_call.1} parent=1 // pred_check
      _
    $region3: #{tpu_custom_call.1} parent=1 // pred_check_branch
      %9 = sbr.rel (0) target = $region5
    $region4: #{tpu_custom_call.1} parent=1 // pred_region
      _
    $region5: #{tpu_custom_call.1} parent=1 // pred_fallthru
      _
    // Predicated region
    $region6: #{tpu_custom_call.1} parent=1 // pred_check
      _
    $region7: #{tpu_custom_call.1} parent=1 // pred_check_branch
      %11 = sbr.rel (0) target = $region9
    $region8: #{tpu_custom_call.1} parent=1 // pred_region
      _
    $region9: #{tpu_custom_call.1} parent=1 // pred_fallthru
      _
    %v12 = vld [vmem:[%s1] sm:$0xff]
    %v13 = vld [vmem:[%s0] sm:$0xff]
    %vm14 = vcmask 261120
    %v15 = vsel %vm14, %v13, -inf
    %16 = vmax.xlane.f32.xlu0 %v15
    %v17 = vpop.xlane.xlu0 %16
    %v18 = vsub.f32 %v13, %v17
    %v19 = vmul.f32 %v18, 1.442695
    %v20 = vpow.pop %v19
    %v21 = vsel %vm14, %v20, 0.0
    %22 = vadd.xlane.f32.xlu0 %v21
    %v23 = vpop.xlane.xlu0 %22
    %v24 = vadd.f32 %v23, 0.0
    %v25 = vsel %vm14, %v18, 0.0
    %26 = vadd.xlane.f32.xlu0 %v25
    %v27 = vpop.xlane.xlu0 %26
    %v28 = vadd.f32 %v27, 0.0
    %v29 = vlaneseq
    %v30 = vand.u32 %v29, 127
    %31 = vset.pattern.permute.xlu0 0
    %32 = vperm.xlu0 %31, %v12
    %v33 = vpop.permute.xlu0 %32
    %vm34 = vcmp.eq.s32.totalorder %v30, %v33
    %v35 = vsel %vm34, %v18, 0.0
    %v36 = vsel %vm14, %v35, 0.0
    %37 = vadd.xlane.f32.xlu0 %v36
    %v38 = vpop.xlane.xlu0 %37
    %v39 = vadd.f32 %v38, 0.0
    %v40 = vlog2.pop %v24
    %v41 = vmul.f32 %v40, 0.6931472
    %v42 = vsub.f32 %v39, %v41
    %v43 = vmul.f32 %v41, 32.0
    %v44 = vsub.f32 %v28, %v43
    %v45 = vmul.f32 %v42, 0.8967742
    %v46 = vmul.f32 %v44, 0.0032258064
    %v47 = vadd.f32 %v45, %v46
    %v48 = vsub.f32 0.0, %v47
    %s49 = smul.u32 0, 8
    %v50 = vlaneseq
    %v51 = vshrl.u32 %v50, 7
    %v52 = vstv %s49
    %v53 = vadd.s32 %v52, %v51
    %vm54 = vcmp.lt.s32.totalorder %v53, 8
    %v55 = vsel %vm54, %v48, 0.0
    %v56 = vrot.slane %v55, 4
    %v57 = vadd.f32 %v55, %v56
    %v58 = vrot.slane %v57, 2
    %v59 = vadd.f32 %v57, %v58
    %v60 = vrot.slane %v59, 1
    %v61 = vadd.f32 %v59, %v60
    %vm62 = vcmask 0
    %63 = vst.msk [vmem:[#allocation2] sm:$0x1] %vm62, %v61
    // Predicated region
    $region10: #{tpu_custom_call.1} parent=1 // pred_check
      _
    $region11: #{tpu_custom_call.1} parent=1 // pred_check_branch
      %65 = sbr.rel (0) target = $region13
    $region12: #{tpu_custom_call.1} parent=1 // pred_region
      %67 = vsyncadd [#allocation3], 0
      %s69 = sshll.u32 [#allocation2], 4
      %s70 = int_to_ptr.vmem [resolvable:$true] %s69
      %s71 = sshll.u32 %s2, 4
      %s72 = int_to_ptr.hbm [resolvable:$true] %s71
      %74 = dma.vmem_to_hbm [thread:$0]  %s70, 16, %s72, [#allocation3]
    $region13: #{tpu_custom_call.1} parent=1 // pred_fallthru
      _
    // Predicated region
    $region14: #{tpu_custom_call.1} parent=1 // pred_check
      _
    $region15: #{tpu_custom_call.1} parent=1 // pred_check_branch
      %76 = sbr.rel (0) target = $region17
    $region16: #{tpu_custom_call.1} parent=1 // pred_region
      %78 = dma.done [#allocation3], 16
    $region17: #{tpu_custom_call.1} parent=1 // pred_fallthru
      _
    %79 = vsyncpa [#allocation3], 1

</llo_original>
